<compile_context>
chip_gen: v7x
topology: tpu7x:2x2x1
jax: 0.10.0
libtpu: 0.0.40
codegen_flags: <defaults>
</compile_context>

<pallas_src>
import functools
import math

import jax
import jax.numpy as jnp
from jax.experimental import pallas as pl
from jax.experimental.pallas import tpu as pltpu

_VMEM_BUDGET = 12 * 1024 * 1024  # safe under v5e's 16 MiB default scoped VMEM


def _round_up(x, m):
    return (x + m - 1) // m * m


def _pick_tile(n, unit, desired, max_waste_frac=0.10):
    """Largest multiple of `unit` <= desired whose round_up padding waste is bounded."""
    n = max(int(n), 1)
    desired = max(unit, _round_up(desired, unit))
    limit = max(int(max_waste_frac * n), unit)
    start = min(desired, _round_up(n, unit))
    tile = unit
    for t in range(start, unit - 1, -unit):
        if _round_up(n, t) - n <= limit:
            tile = t
            break
    return tile, _round_up(n, tile)


def _divisor_tile(padded, unit, desired):
    """Largest multiple of `unit` that divides `padded` and is <= desired."""
    best = unit
    n_units = padded // unit
    for d in range(1, n_units + 1):
        if n_units % d == 0 and d * unit <= desired:
            best = d * unit
    return best


class GCNPlan:
    def __init__(self, n, dout, mp, kp, dout_p, tm, tk, tn, support_resident, vmem_bytes):
        self.n, self.dout = n, dout
        self.mp, self.kp, self.dout_p = mp, kp, dout_p
        self.tm, self.tk, self.tn = tm, tk, tn
        self.support_resident = support_resident
        self.vmem_bytes = vmem_bytes


def plan_gcn_tiles(n, dout, adj_bytes, sup_bytes, out_bytes):
    """Tile plan for the aggregation kernel, budgeted to ~12 MiB of scoped VMEM."""
    dout_p = _round_up(dout, 128)
    # Collapse the Dout axis whenever it is small: adj is then streamed exactly once.
    tn = dout_p if dout_p <= 1024 else _divisor_tile(dout_p, 128, 512)

    desired_tm = 512
    if _round_up(n, 16) < 2 * desired_tm:
        # Keep >= 2 row tiles when possible so the "parallel" i axis can feed both
        # TensorCores on v7x megacore.
        desired_tm = max(16, _round_up((n + 1) // 2, 16))
    tm0, _ = _pick_tile(n, 16, desired_tm)
    tk0, _ = _pick_tile(n, 128, 2048)

    tm_cands = sorted({tm0, min(tm0, 256), min(tm0, 128), min(tm0, 64),
                       min(tm0, 32), min(tm0, 16)}, reverse=True)
    tk_cands = sorted({tk0, min(tk0, 1024), min(tk0, 512), min(tk0, 256),
                       min(tk0, 128)}, reverse=True)

    def footprint(tm_, tk_, kp_, resident):
        adj_buf = 2 * tm_ * tk_ * adj_bytes                                # double-buffered adj
        sup_buf = 2 * (kp_ * dout_p if resident else tk_ * tn) * sup_bytes  # support (resident or streamed)
        out_buf = 2 * tm_ * tn * out_bytes
        acc_buf = tm_ * tn * 4
        return adj_buf + sup_buf + out_buf + acc_buf + 2 * tn * 4

    best = None
    for resident in (True, False):          # prefer VMEM-resident support
        for tk_ in tk_cands:
            kp_ = _round_up(n, tk_)
            for tm_ in tm_cands:
                mp_ = _round_up(n, tm_)
                fp = footprint(tm_, tk_, kp_, resident)
                cand = GCNPlan(n, dout, mp_, kp_, dout_p, tm_, tk_, tn, resident, fp)
                if fp <= _VMEM_BUDGET:
                    return cand
                if best is None or fp < best.vmem_bytes:
                    best = cand
    return best  # over-budget fallback (the vmem limit on the call is raised to match)


def prepare_adjacency(adj, dout, *, compute_dtype=jnp.bfloat16, out_dtype=jnp.float32):
    """Cast + pad the dense adjacency ONCE per graph; reuse across layers / steps.

    gcn_forward detects the prepared shape/dtype and skips its own cast+pad pass,
    so the Pallas kernel becomes the only adj reader.
    """
    n = adj.shape[0]
    plan = plan_gcn_tiles(n, dout, jnp.dtype(compute_dtype).itemsize, 4,
                          jnp.dtype(out_dtype).itemsize)
    return jnp.pad(adj.astype(compute_dtype), ((0, plan.mp - n), (0, plan.kp - n)))


# --------------------- stage 1: support = X @ W (feature transform) ---------------------
def _support_kernel(x_ref, w_ref, out_ref):
    out_ref[...] = jnp.dot(x_ref[...], w_ref[...],
                           preferred_element_type=jnp.float32).astype(out_ref.dtype)


def _compute_support(x, weight, plan, din):
    kp, dout_p = plan.kp, plan.dout_p
    din_p = _round_up(din, 128)                       # lane-dense x / w inner dim
    n = x.shape[0]
    x_p = jnp.pad(x, ((0, kp - n), (0, din_p - din)))
    w_p = jnp.pad(weight, ((0, din_p - din), (0, dout_p - weight.shape[1])))

    row_tile = _divisor_tile(kp, 128, 512)            # decoupled from the stage-2 K tile
    tn1 = _divisor_tile(dout_p, 128, 512)

    def fp(rt, tc):
        return 2 * 4 * (rt * din_p + din_p * tc + rt * tc)

    while fp(row_tile, tn1) > _VMEM_BUDGET and row_tile > 128:
        row_tile = _divisor_tile(kp, 128, row_tile // 2)
    while fp(row_tile, tn1) > _VMEM_BUDGET and tn1 > 128:
        tn1 = _divisor_tile(dout_p, 128, tn1 // 2)
    # TODO(synk): for very large Din (>~4K) also tile the Din reduction axis here.
    limit = min(32 << 20, max(16 << 20, fp(row_tile, tn1) + (2 << 20)))

    return pl.pallas_call(
        _support_kernel,
        out_shape=jax.ShapeDtypeStruct((kp, dout_p), jnp.float32),   # f32 support (single rounding)
        grid=(kp // row_tile, dout_p // tn1),
        in_specs=[
            pl.BlockSpec((row_tile, din_p), lambda i, j: (i, 0)),
            pl.BlockSpec((din_p, tn1), lambda i, j: (0, j)),
        ],
        out_specs=pl.BlockSpec((row_tile, tn1), lambda i, j: (i, j)),
        compiler_params=pltpu.CompilerParams(
            dimension_semantics=("parallel", "parallel"),
            vmem_limit_bytes=limit),
    )(x_p, w_p)


# --------------------- stage 2: output = A @ support + b (aggregation) ------------------
def _aggregate_kernel(adj_ref, s_ref, b_ref, out_ref, acc_ref, *,
                      tk, tn, support_resident, mxu_dtype):
    k = pl.program_id(2)

    @pl.when(k == 0)
    def _():
        acc_ref[...] = jnp.zeros_like(acc_ref)

    if support_resident:
        # Whole support slab lives in VMEM; slice the (tk, tn) block we need.
        j = pl.program_id(1)
        s_blk = s_ref[pl.ds(pl.multiple_of(k * tk, 128), tk),
                      pl.ds(pl.multiple_of(j * tn, 128), tn)]
    else:
        s_blk = s_ref[...]

    # MXU inputs in compute_dtype (bf16 keeps full MXU rate), f32 accumulation.
    acc_ref[...] += jnp.dot(adj_ref[...].astype(mxu_dtype), s_blk.astype(mxu_dtype),
                            preferred_element_type=jnp.float32)

    @pl.when(k == pl.num_programs(2) - 1)
    def _():
        # Bias added once, in f32, at finalize; downcast only at the final store.
        out_ref[...] = (acc_ref[...] + b_ref[...].astype(jnp.float32)).astype(out_ref.dtype)


def gcn_forward(adj, x, weight, bias=None, *, compute_dtype=jnp.bfloat16):
    """adj: [N, N] dense (or prepared via prepare_adjacency), x: [N, Din],
    weight: [Din, Dout], bias: [Dout] -> [N, Dout].

    TODO(synk): torch.sparse.mm's sparse adjacency is aggregated densely here; a
    sparsity-aware version would prefetch per-row-block nonzero column lists via
    PrefetchScalarGridSpec and skip all-zero adj tiles.
    TODO(synk): optional int8 (v5e/v6e) / fp8 (v7x) adj quantization would halve the
    dominant HBM stream again; not enabled to keep accuracy semantics of the module.
    """
    n, din = x.shape
    assert weight.shape[0] == din, f"input dimension error, expected {weight.shape[0]}"
    dout = weight.shape[1]
    out_dtype = x.dtype

    plan = plan_gcn_tiles(n, dout,
                          jnp.dtype(compute_dtype).itemsize, 4,
                          jnp.dtype(out_dtype).itemsize)

    # Amortized adj preparation: accept an already cast+padded adjacency as-is.
    if adj.shape == (plan.mp, plan.kp) and adj.dtype == jnp.dtype(compute_dtype):
        adj_p = adj
    else:
        assert adj.shape == (n, n)
        adj_p = jnp.pad(adj.astype(compute_dtype),
                        ((0, plan.mp - n), (0, plan.kp - n)))

    if bias is None:
        bias = jnp.zeros((dout,), dtype=jnp.float32)
    b_p = jnp.pad(bias.astype(jnp.float32), (0, plan.dout_p - dout)).reshape(1, plan.dout_p)

    # Stage 1: support = X @ W in f32 (tiny compared to A @ support).
    support_p = _compute_support(x, weight, plan, din)

    # Stage 2: out = A @ support + b, tiled, f32 accumulator resident across K.
    grid = (plan.mp // plan.tm, plan.dout_p // plan.tn, plan.kp // plan.tk)
    if plan.support_resident:
        s_spec = pl.BlockSpec((plan.kp, plan.dout_p), lambda i, j, k: (0, 0))
    else:
        s_spec = pl.BlockSpec((plan.tk, plan.tn), lambda i, j, k: (k, j))

    kernel = functools.partial(_aggregate_kernel, tk=plan.tk, tn=plan.tn,
                               support_resident=plan.support_resident,
                               mxu_dtype=jnp.dtype(compute_dtype))
    vmem_limit = min(32 << 20, max(16 << 20, plan.vmem_bytes + (4 << 20)))

    out_p = pl.pallas_call(
        kernel,
        out_shape=jax.ShapeDtypeStruct((plan.mp, plan.dout_p), out_dtype),
        grid=grid,
        in_specs=[
            pl.BlockSpec((plan.tm, plan.tk), lambda i, j, k: (i, k)),   # adj tile (streamed once)
            s_spec,                                                     # support (resident or streamed)
            pl.BlockSpec((1, plan.tn), lambda i, j, k: (0, j)),         # bias tile
        ],
        out_specs=pl.BlockSpec((plan.tm, plan.tn), lambda i, j, k: (i, j)),
        scratch_shapes=[pltpu.VMEM((plan.tm, plan.tn), jnp.float32)],
        compiler_params=pltpu.CompilerParams(
            dimension_semantics=("parallel", "parallel", "arbitrary"),
            vmem_limit_bytes=vmem_limit),
    )(adj_p, support_p, b_p)

    return out_p[:n, :dout]


def init_gcn_params(key, input_dim, output_dim, dtype=jnp.float32):
    """Deterministic kaiming_uniform_ (gain=sqrt(2), fan_in = weight.size(1)) + zero bias."""
    fan_in = output_dim  # PyTorch fan_in for a 2D [input_dim, output_dim] tensor is size(1)
    bound = math.sqrt(2.0) * math.sqrt(3.0 / fan_in)
    weight = jax.random.uniform(key, (input_dim, output_dim), dtype=dtype,
                                minval=-bound, maxval=bound)
    bias = jnp.zeros((output_dim,), dtype=dtype)
    return weight, bias


def _make_adj(key, n):
    a_raw = (jax.random.uniform(key, (n, n)) > 0.5).astype(jnp.float32)
    adj = a_raw + a_raw.T + jnp.eye(n, dtype=jnp.float32)
    return adj / jnp.sum(adj, axis=1, keepdims=True)


if __name__ == "__main__":
    key = jax.random.PRNGKey(0)
    k_w1, k_x1, k_a1, k_w2, k_x2, k_a2 = jax.random.split(key, 6)

    # ---------- case 1: tiny shapes from the module spec ----------
    N1, DIN1, DOUT1 = 8, 16, 32
    w1, b1 = init_gcn_params(k_w1, DIN1, DOUT1)
    x1 = jax.random.normal(k_x1, (N1, DIN1), dtype=jnp.float32)
    adj1 = _make_adj(k_a1, N1)
    ref1 = adj1 @ (x1 @ w1) + b1[None, :]

    out1_f32 = gcn_forward(adj1, x1, w1, b1, compute_dtype=jnp.float32)
    jax.block_until_ready(out1_f32)
    assert out1_f32.shape == (N1, DOUT1)
    assert jnp.allclose(out1_f32, ref1, atol=1e-5, rtol=1e-5)

    out1_bf16 = gcn_forward(adj1, x1, w1, b1, compute_dtype=jnp.bfloat16)
    jax.block_until_ready(out1_bf16)
    assert jnp.allclose(out1_bf16, ref1, atol=5e-2, rtol=5e-2)

    # ---------- case 2: non-divisible shapes + amortized adj preparation ----------
    N2, DIN2, DOUT2 = 300, 48, 160
    w2, b2 = init_gcn_params(k_w2, DIN2, DOUT2)
    x2 = jax.random.normal(k_x2, (N2, DIN2), dtype=jnp.float32)
    adj2 = _make_adj(k_a2, N2)
    ref2 = adj2 @ (x2 @ w2) + b2[None, :]

    out2_f32 = gcn_forward(adj2, x2, w2, b2, compute_dtype=jnp.float32)
    jax.block_until_ready(out2_f32)
    assert out2_f32.shape == (N2, DOUT2)
    assert jnp.allclose(out2_f32, ref2, atol=1e-4, rtol=1e-4)

    adj2_prep = prepare_adjacency(adj2, DOUT2, compute_dtype=jnp.bfloat16,
                                  out_dtype=x2.dtype)          # once per graph
    out2_bf16 = gcn_forward(adj2_prep, x2, w2, b2, compute_dtype=jnp.bfloat16)
    jax.block_until_ready(out2_bf16)
    assert out2_bf16.shape == (N2, DOUT2)
    assert jnp.allclose(out2_bf16, ref2, atol=5e-2, rtol=5e-2)

    print("KERNEL_OK")
</pallas_src>

<mosaic_0001>
module attributes {stable_mosaic.version = 11 : i64} {
  func.func @_support_kernel(%arg0: i32, %arg1: i32, %arg2: memref<128x128xf32, #tpu.memory_space<vmem>>, %arg3: memref<128x128xf32, #tpu.memory_space<vmem>>, %arg4: memref<128x128xf32, #tpu.memory_space<vmem>>) attributes {dimension_semantics = [#tpu.dimension_semantics<parallel>, #tpu.dimension_semantics<parallel>], iteration_bounds = array<i64: 1, 1>, scalar_prefetch = 0 : i64, scratch_operands = 0 : i64, tpu.core_type = #tpu.core_type<tc>, window_params = [{transform_indices = @transform_0, window_bounds = array<i64: 128, 128>}, {transform_indices = @transform_1, window_bounds = array<i64: 128, 128>}, {transform_indices = @transform_2, window_bounds = array<i64: 128, 128>}]} {
    %c0 = arith.constant 0 : index
    %c0_0 = arith.constant 0 : index
    %0 = vector.load %arg2[%c0, %c0_0] : memref<128x128xf32, #tpu.memory_space<vmem>>, vector<128x128xf32>
    %c0_1 = arith.constant 0 : index
    %c0_2 = arith.constant 0 : index
    %1 = vector.load %arg3[%c0_1, %c0_2] : memref<128x128xf32, #tpu.memory_space<vmem>>, vector<128x128xf32>
    %cst = arith.constant dense<0.000000e+00> : vector<128x128xf32>
    %2 = tpu.matmul %0, %1, %cst {dimension_numbers = #tpu.dot_dimension_numbers<[1], [0], [0], [1], [0, 0, 1, 1], [], []>} : vector<128x128xf32>, vector<128x128xf32>, vector<128x128xf32> -> vector<128x128xf32>
    %c0_3 = arith.constant 0 : index
    %c0_4 = arith.constant 0 : index
    %3 = vector.load %arg4[%c0_3, %c0_4] : memref<128x128xf32, #tpu.memory_space<vmem>>, vector<128x128xf32>
    tpu.vector_store %arg4[%c0_3, %c0_4], %2 {strides = array<i32>} : memref<128x128xf32, #tpu.memory_space<vmem>>, vector<128x128xf32>,
    return
  }
  func.func @transform_0(%arg0: i32, %arg1: i32) -> (i32, i32) {
    %c0_i32 = arith.constant 0 : i32
    %c0_i32_0 = arith.constant 0 : i32
    return %arg0, %c0_i32 : i32, i32
  }
  func.func @transform_1(%arg0: i32, %arg1: i32) -> (i32, i32) {
    %c0_i32 = arith.constant 0 : i32
    %c0_i32_0 = arith.constant 0 : i32
    return %c0_i32, %arg1 : i32, i32
  }
  func.func @transform_2(%arg0: i32, %arg1: i32) -> (i32, i32) {
    %c0_i32 = arith.constant 0 : i32
    return %arg0, %arg1 : i32, i32
  }
}

</mosaic_0001>

<llo_original>
// kernel: tpu_custom_call.1
$region0: #{tpu_custom_call.1}
  #allocation0 [shape = 'u32[]', space=smem, size = 0x4, offset = 0x4, fixed_abs, tag = 'smem constant byte address 0x4 - core index']
  #allocation1 [shape = 'u32[144,128]{1,0:T(1,128)}', space=vmem, size = 0x12000, scoped, tag = 'internal scratch']
  %s0 = inlined_call_operand.hbm [shape: f32[128,128], index: 0, kind: input, shape index: {}]
  %s1 = inlined_call_operand.hbm [shape: f32[128,128], index: 1, kind: input, shape index: {}]
  %s2 = inlined_call_operand.hbm [shape: f32[128,128], index: 2, kind: output, shape index: {}]
  %s3 = sld [smem:[#allocation0]]
  $region26: #{tpu_custom_call.1} parent=0
    _
  %s5 = ssub.s32 1, %s3
  %s6 = scalar_select 0, %s5, %s3
  $region1: #{tpu_custom_call.1} parent=0
    #allocation2 [shape = 'u8[65536]{0}', space=vmem, size = 0x10000, scoped, tag = 'input window, operand 0, single buffered']
    #allocation3 [shape = 's32[1]{0}', space=sflag, size = 0x4, scoped, tag = 'scoped memory for tpu_custom_call.1']
    #allocation4 [shape = 's32[1]{0}', space=sflag, size = 0x4, scoped, tag = 'scoped memory for tpu_custom_call.1']
    #allocation5 [shape = 'u8[65536]{0}', space=vmem, size = 0x10000, scoped, tag = 'input window, operand 1, single buffered']
    #allocation6 [shape = 's32[1]{0}', space=sflag, size = 0x4, scoped, tag = 'scoped memory for tpu_custom_call.1']
    #allocation7 [shape = 'u8[65536]{0}', space=vmem, size = 0x10000, scoped, tag = 'output window, operand 0, single buffered']
    %7 = vsyncpa [#allocation3], 0
    %8 = vsyncpa [#allocation6], 0
    %9 = vsyncpa [#allocation4], 0
    // Predicated region
    $region2: #{tpu_custom_call.1} parent=1 // pred_check
      _
    $region3: #{tpu_custom_call.1} parent=1 // pred_check_branch
      %11 = sbr.rel (0) target = $region5
    $region4: #{tpu_custom_call.1} parent=1 // pred_region
      %s13 = ssub.s32 2048, 2048
      %14 = vsyncadd [#allocation3], %s13
      %s15 = sshll.u32 [#allocation2], 4
      %s16 = int_to_ptr.vmem [resolvable:$true] %s15
      %21 = dma.hbm_to_vmem [thread:$0]  %s0, 2048, %s16, [#allocation3], 128, 128, 8
    $region5: #{tpu_custom_call.1} parent=1 // pred_fallthru
      _
    // Predicated region
    $region6: #{tpu_custom_call.1} parent=1 // pred_check
      _
    $region7: #{tpu_custom_call.1} parent=1 // pred_check_branch
      %23 = sbr.rel (0) target = $region9
    $region8: #{tpu_custom_call.1} parent=1 // pred_region
      %s25 = ssub.s32 2048, 2048
      %26 = vsyncadd [#allocation6], %s25
      %s27 = sshll.u32 [#allocation5], 4
      %s28 = int_to_ptr.vmem [resolvable:$true] %s27
      %33 = dma.hbm_to_vmem [thread:$0]  %s1, 2048, %s28, [#allocation6], 128, 128, 8
    $region9: #{tpu_custom_call.1} parent=1 // pred_fallthru
      _
    // Predicated region
    $region10: #{tpu_custom_call.1} parent=1 // pred_check
      _
    $region11: #{tpu_custom_call.1} parent=1 // pred_check_branch
      %35 = sbr.rel (0) target = $region13
    $region12: #{tpu_custom_call.1} parent=1 // pred_region
      %36 = dma.done [#allocation3], 2048
    $region13: #{tpu_custom_call.1} parent=1 // pred_fallthru
      _
    // Predicated region
    $region14: #{tpu_custom_call.1} parent=1 // pred_check
      _
    $region15: #{tpu_custom_call.1} parent=1 // pred_check_branch
      %38 = sbr.rel (0) target = $region17
    $region16: #{tpu_custom_call.1} parent=1 // pred_region
      %39 = dma.done [#allocation6], 2048
    $region17: #{tpu_custom_call.1} parent=1 // pred_fallthru
      _
    %v40 = vld [vmem:[#allocation2] sm:$0xff]
    %v41 = vld [vmem:[#allocation2 + $0x8] sm:$0xff]
    %v42 = vld [vmem:[#allocation2 + $0x10] sm:$0xff]
    %v43 = vld [vmem:[#allocation2 + $0x18] sm:$0xff]
    %v44 = vld [vmem:[#allocation2 + $0x20] sm:$0xff]
    %v45 = vld [vmem:[#allocation2 + $0x28] sm:$0xff]
    %v46 = vld [vmem:[#allocation2 + $0x30] sm:$0xff]
    %v47 = vld [vmem:[#allocation2 + $0x38] sm:$0xff]
    %v48 = vld [vmem:[#allocation2 + $0x40] sm:$0xff]
    %v49 = vld [vmem:[#allocation2 + $0x48] sm:$0xff]
    %v50 = vld [vmem:[#allocation2 + $0x50] sm:$0xff]
    %v51 = vld [vmem:[#allocation2 + $0x58] sm:$0xff]
    %v52 = vld [vmem:[#allocation2 + $0x60] sm:$0xff]
    %v53 = vld [vmem:[#allocation2 + $0x68] sm:$0xff]
    %v54 = vld [vmem:[#allocation2 + $0x70] sm:$0xff]
    %v55 = vld [vmem:[#allocation2 + $0x78] sm:$0xff]
    %v56 = vld [vmem:[#allocation5] sm:$0xff]
    %v57 = vld [vmem:[#allocation5 + $0x8] sm:$0xff]
    %v58 = vld [vmem:[#allocation5 + $0x10] sm:$0xff]
    %v59 = vld [vmem:[#allocation5 + $0x18] sm:$0xff]
    %v60 = vld [vmem:[#allocation5 + $0x20] sm:$0xff]
    %v61 = vld [vmem:[#allocation5 + $0x28] sm:$0xff]
    %v62 = vld [vmem:[#allocation5 + $0x30] sm:$0xff]
    %v63 = vld [vmem:[#allocation5 + $0x38] sm:$0xff]
    %v64 = vld [vmem:[#allocation5 + $0x40] sm:$0xff]
    %v65 = vld [vmem:[#allocation5 + $0x48] sm:$0xff]
    %v66 = vld [vmem:[#allocation5 + $0x50] sm:$0xff]
    %v67 = vld [vmem:[#allocation5 + $0x58] sm:$0xff]
    %v68 = vld [vmem:[#allocation5 + $0x60] sm:$0xff]
    %v69 = vld [vmem:[#allocation5 + $0x68] sm:$0xff]
    %v70 = vld [vmem:[#allocation5 + $0x70] sm:$0xff]
    %v71 = vld [vmem:[#allocation5 + $0x78] sm:$0xff]
    %72 = vmatprep.subr.mxu0 0.0
    %73 = vmatpush1.msra.mxu0 %v56
    %74 = vmatprep.subr.mxu0 0.0
    %75 = vmatpush1.msra.mxu0 %v57
    %76 = vmatprep.subr.mxu0 0.0
    %77 = vmatpush1.msra.mxu0 %v58
    %78 = vmatprep.subr.mxu0 0.0
    %79 = vmatpush1.msra.mxu0 %v59
    %80 = vmatprep.subr.mxu0 0.0
    %81 = vmatpush1.msra.mxu0 %v60
    %82 = vmatprep.subr.mxu0 0.0
    %83 = vmatpush1.msra.mxu0 %v61
    %84 = vmatprep.subr.mxu0 0.0
    %85 = vmatpush1.msra.mxu0 %v62
    %86 = vmatprep.subr.mxu0 0.0
    %87 = vmatpush1.msra.mxu0 %v63
    %88 = vmatprep.subr.mxu0 0.0
    %89 = vmatpush1.msra.mxu0 %v64
    %90 = vmatprep.subr.mxu0 0.0
    %91 = vmatpush1.msra.mxu0 %v65
    %92 = vmatprep.subr.mxu0 0.0
    %93 = vmatpush1.msra.mxu0 %v66
    %94 = vmatprep.subr.mxu0 0.0
    %95 = vmatpush1.msra.mxu0 %v67
    %96 = vmatprep.subr.mxu0 0.0
    %97 = vmatpush1.msra.mxu0 %v68
    %98 = vmatprep.subr.mxu0 0.0
    %99 = vmatpush1.msra.mxu0 %v69
    %100 = vmatprep.subr.mxu0 0.0
    %101 = vmatpush1.msra.mxu0 %v70
    %102 = vmatprep.subr.mxu0 0.0
    %103 = vmatpush1.msra.mxu0 %v71
    %104 = vmatprep.subr.mxu0 0.0
    %105 = vmatpush1.msra.mxu0 0.0
    %106 = vmatprep.subr.mxu0 0.0
    %107 = vmatpush1.msra.mxu0 0.0
    %108 = vmatprep.subr.mxu0 0.0
    %109 = vmatpush1.msra.mxu0 0.0
    %110 = vmatprep.subr.mxu0 0.0
    %111 = vmatpush1.msra.mxu0 0.0
    %112 = vmatprep.subr.mxu0 0.0
    %113 = vmatpush1.msra.mxu0 0.0
    %114 = vmatprep.subr.mxu0 0.0
    %115 = vmatpush1.msra.mxu0 0.0
    %116 = vmatprep.subr.mxu0 0.0
    %117 = vmatpush1.msra.mxu0 0.0
    %118 = vmatprep.subr.mxu0 0.0
    %119 = vmatpush1.msra.mxu0 0.0
    %120 = vmatprep.subr.mxu0 0.0
    %121 = vmatpush1.msra.mxu0 0.0
    %122 = vmatprep.subr.mxu0 0.0
    %123 = vmatpush1.msra.mxu0 0.0
    %124 = vmatprep.subr.mxu0 0.0
    %125 = vmatpush1.msra.mxu0 0.0
    %126 = vmatprep.subr.mxu0 0.0
    %127 = vmatpush1.msra.mxu0 0.0
    %128 = vmatprep.subr.mxu0 0.0
    %129 = vmatpush1.msra.mxu0 0.0
    %130 = vmatprep.subr.mxu0 0.0
    %131 = vmatpush1.msra.mxu0 0.0
    %132 = vmatprep.subr.mxu0 0.0
    %133 = vmatpush1.msra.mxu0 0.0
    %134 = vmatprep.subr.mxu0 0.0
    %135 = vmatpush1.msra.mxu0 0.0
    %136 = vmatprep.mubr.f32.mxu0 0.0
    %137 = vmatmul.mubr.f32.gmra.mrb[0].mxu0 %v40
    %v138 = vpop.f32.mrb[0].mxu0
    %v139 = vadd.f32 0.0, %v138
    %v140 = vpop.f32.mrb[0].mxu0
    %141 = vmatprep.mubr.f32.mxu0 0.0
    %142 = vmatmul.mubr.f32.gmra.mrb[0].mxu0 %v41
    %v143 = vpop.f32.mrb[0].mxu0
    %v144 = vadd.f32 0.0, %v143
    %v145 = vpop.f32.mrb[0].mxu0
    %146 = vmatprep.mubr.f32.mxu0 0.0
    %147 = vmatmul.mubr.f32.gmra.mrb[0].mxu0 %v42
    %v148 = vpop.f32.mrb[0].mxu0
    %v149 = vadd.f32 0.0, %v148
    %v150 = vpop.f32.mrb[0].mxu0
    %151 = vmatprep.mubr.f32.mxu0 0.0
    %152 = vmatmul.mubr.f32.gmra.mrb[0].mxu0 %v43
    %v153 = vpop.f32.mrb[0].mxu0
    %v154 = vadd.f32 0.0, %v153
    %v155 = vpop.f32.mrb[0].mxu0
    %156 = vmatprep.mubr.f32.mxu0 0.0
    %157 = vmatmul.mubr.f32.gmra.mrb[0].mxu0 %v44
    %v158 = vpop.f32.mrb[0].mxu0
    %v159 = vadd.f32 0.0, %v158
    %v160 = vpop.f32.mrb[0].mxu0
    %161 = vmatprep.mubr.f32.mxu0 0.0
    %162 = vmatmul.mubr.f32.gmra.mrb[0].mxu0 %v45
    %v163 = vpop.f32.mrb[0].mxu0
    %v164 = vadd.f32 0.0, %v163
    %v165 = vpop.f32.mrb[0].mxu0
    %166 = vmatprep.mubr.f32.mxu0 0.0
    %167 = vmatmul.mubr.f32.gmra.mrb[0].mxu0 %v46
    %v168 = vpop.f32.mrb[0].mxu0
    %v169 = vadd.f32 0.0, %v168
    %v170 = vpop.f32.mrb[0].mxu0
    %171 = vmatprep.mubr.f32.mxu0 0.0
    %172 = vmatmul.mubr.f32.gmra.mrb[0].mxu0 %v47
    %v173 = vpop.f32.mrb[0].mxu0
    %v174 = vadd.f32 0.0, %v173
    %v175 = vpop.f32.mrb[0].mxu0
    %176 = vmatprep.mubr.f32.mxu0 0.0
    %177 = vmatmul.mubr.f32.gmra.mrb[0].mxu0 %v48
    %v178 = vpop.f32.mrb[0].mxu0
    %v179 = vadd.f32 0.0, %v178
    %v180 = vpop.f32.mrb[0].mxu0
    %181 = vmatprep.mubr.f32.mxu0 0.0
    %182 = vmatmul.mubr.f32.gmra.mrb[0].mxu0 %v49
    %v183 = vpop.f32.mrb[0].mxu0
    %v184 = vadd.f32 0.0, %v183
    %v185 = vpop.f32.mrb[0].mxu0
    %186 = vmatprep.mubr.f32.mxu0 0.0
    %187 = vmatmul.mubr.f32.gmra.mrb[0].mxu0 %v50
    %v188 = vpop.f32.mrb[0].mxu0
    %v189 = vadd.f32 0.0, %v188
    %v190 = vpop.f32.mrb[0].mxu0
    %191 = vmatprep.mubr.f32.mxu0 0.0
    %192 = vmatmul.mubr.f32.gmra.mrb[0].mxu0 %v51
    %v193 = vpop.f32.mrb[0].mxu0
    %v194 = vadd.f32 0.0, %v193
    %v195 = vpop.f32.mrb[0].mxu0
    %196 = vmatprep.mubr.f32.mxu0 0.0
    %197 = vmatmul.mubr.f32.gmra.mrb[0].mxu0 %v52
    %v198 = vpop.f32.mrb[0].mxu0
    %v199 = vadd.f32 0.0, %v198
    %v200 = vpop.f32.mrb[0].mxu0
    %201 = vmatprep.mubr.f32.mxu0 0.0
    %202 = vmatmul.mubr.f32.gmra.mrb[0].mxu0 %v53
    %v203 = vpop.f32.mrb[0].mxu0
    %v204 = vadd.f32 0.0, %v203
    %v205 = vpop.f32.mrb[0].mxu0
    %206 = vmatprep.mubr.f32.mxu0 0.0
    %207 = vmatmul.mubr.f32.gmra.mrb[0].mxu0 %v54
    %v208 = vpop.f32.mrb[0].mxu0
    %v209 = vadd.f32 0.0, %v208
    %v210 = vpop.f32.mrb[0].mxu0
    %211 = vmatprep.mubr.f32.mxu0 0.0
    %212 = vmatmul.mubr.f32.gmra.mrb[0].mxu0 %v55
    %v213 = vpop.f32.mrb[0].mxu0
    %v214 = vadd.f32 0.0, %v213
    %v215 = vpop.f32.mrb[0].mxu0
    %216 = vdwg.mxu0
    %217 = vst [vmem:[#allocation7] sm:$0xff] %v139
    %218 = vst [vmem:[#allocation7 + $0x8] sm:$0xff] %v144
    %219 = vst [vmem:[#allocation7 + $0x10] sm:$0xff] %v149
    %220 = vst [vmem:[#allocation7 + $0x18] sm:$0xff] %v154
    %221 = vst [vmem:[#allocation7 + $0x20] sm:$0xff] %v159
    %222 = vst [vmem:[#allocation7 + $0x28] sm:$0xff] %v164
    %223 = vst [vmem:[#allocation7 + $0x30] sm:$0xff] %v169
    %224 = vst [vmem:[#allocation7 + $0x38] sm:$0xff] %v174
    %225 = vst [vmem:[#allocation7 + $0x40] sm:$0xff] %v179
    %226 = vst [vmem:[#allocation7 + $0x48] sm:$0xff] %v184
    %227 = vst [vmem:[#allocation7 + $0x50] sm:$0xff] %v189
    %228 = vst [vmem:[#allocation7 + $0x58] sm:$0xff] %v194
    %229 = vst [vmem:[#allocation7 + $0x60] sm:$0xff] %v199
    %230 = vst [vmem:[#allocation7 + $0x68] sm:$0xff] %v204
    %231 = vst [vmem:[#allocation7 + $0x70] sm:$0xff] %v209
    %232 = vst [vmem:[#allocation7 + $0x78] sm:$0xff] %v214
    // Predicated region
    $region18: #{tpu_custom_call.1} parent=1 // pred_check
      _
    $region19: #{tpu_custom_call.1} parent=1 // pred_check_branch
      %234 = sbr.rel (0) target = $region21
    $region20: #{tpu_custom_call.1} parent=1 // pred_region
      %s236 = ssub.s32 2048, 2048
      %237 = vsyncadd [#allocation4], %s236
      %s238 = sshll.u32 [#allocation7], 4
      %s239 = int_to_ptr.vmem [resolvable:$true] %s238
      %244 = dma.vmem_to_hbm [thread:$0]  %s239, 2048, %s2, [#allocation4], 128, 128, 8
    $region21: #{tpu_custom_call.1} parent=1 // pred_fallthru
      _
    // Predicated region
    $region22: #{tpu_custom_call.1} parent=1 // pred_check
      _
    $region23: #{tpu_custom_call.1} parent=1 // pred_check_branch
      %246 = sbr.rel (0) target = $region25
    $region24: #{tpu_custom_call.1} parent=1 // pred_region
      %247 = dma.done [#allocation4], 2048
    $region25: #{tpu_custom_call.1} parent=1 // pred_fallthru
      _
    %248 = vsyncpa [#allocation3], 1
    %249 = vsyncpa [#allocation6], 1
    %250 = vsyncpa [#allocation4], 1

</llo_original>
